<compile_context>
chip_gen: v5e
topology: v5e:2x2
jax: 0.10.0
libtpu: 0.0.40
codegen_flags: <defaults>
</compile_context>

<pallas_src>
import functools

import jax
import jax.numpy as jnp
from jax.experimental import pallas as pl
from jax.experimental.pallas import tpu as pltpu


def _attention_kernel(xkv_ref, wq_ref, wkv_ref, wp_ref, bp_ref, o_ref, kv_ref,
                      *, num_heads, head_dim, scale, q_tile):
    dim = num_heads * head_dim
    compute_dtype = kv_ref.dtype          # bf16 by default, f32 if requested
    iq = pl.program_id(1)

    # --- K/V projection + head split: ONCE per batch element (iq == 0) -------
    # kv_ref persists across the (arbitrary) q-tile grid axis, so q tiles > 0
    # reuse it; the batch axis is outermost so iq == 0 always runs first.
    @pl.when(iq == 0)
    def _():
        xkv = xkv_ref[0]                                           # (n, dim)
        kv2 = jnp.dot(xkv, wkv_ref[...],
                      preferred_element_type=jnp.float32)          # (n, 2*dim)
        kv2 = kv2.astype(compute_dtype)
        # Head-split relayout happens once per batch element, not per q tile.
        for h in range(num_heads):
            kv_ref[0, h] = kv2[:, h * head_dim:(h + 1) * head_dim]
            kv_ref[1, h] = kv2[:, dim + h * head_dim:dim + (h + 1) * head_dim]

    # --- Q projection for this q tile (sliced from the resident x block) -----
    q_start = pl.multiple_of(iq * q_tile, q_tile)
    xq = xkv_ref[0, pl.ds(q_start, q_tile), :]                     # (tq, dim)
    q2 = jnp.dot(xq, wq_ref[...], preferred_element_type=jnp.float32) * scale
    q2 = q2.astype(compute_dtype)
    # (tq, dim) -> (H, tq, hd); only q_tile rows of relayout per step.
    qh = jnp.stack([q2[:, h * head_dim:(h + 1) * head_dim]
                    for h in range(num_heads)], axis=0)            # (H, tq, hd)

    kh = kv_ref[0]                                                 # (H, n, hd)
    vh = kv_ref[1]                                                 # (H, n, hd)

    # --- head-batched attention ----------------------------------------------
    dots = jnp.einsum('hqd,hkd->hqk', qh, kh,
                      preferred_element_type=jnp.float32)          # (H, tq, n)
    m = jnp.max(dots, axis=-1, keepdims=True)                      # stable softmax
    e = jnp.exp(dots - m)
    l = jnp.sum(e, axis=-1, keepdims=True)                         # (H, tq, 1)

    # Unnormalized P @ V; normalize on the small (H, tq, hd) result instead of
    # the (H, tq, n) score tile (~n/hd fewer VPU multiplies).
    out_h = jnp.einsum('hqk,hkd->hqd', e.astype(compute_dtype), vh,
                       preferred_element_type=jnp.float32)         # (H, tq, hd)
    out_h = out_h * pl.reciprocal(l, approx=True)
    out_h = out_h.astype(compute_dtype)                            # cast BEFORE merge

    # 'b h n d -> b n (h d)': lane-concatenate heads back into (tq, dim).
    merged = jnp.concatenate([out_h[h] for h in range(num_heads)], axis=-1)

    # --- output projection (f32 accumulation, f32 bias, then downcast) -------
    proj = jnp.dot(merged, wp_ref[...],
                   preferred_element_type=jnp.float32) + bp_ref[...]
    o_ref[0] = proj.astype(o_ref.dtype)


def attention_forward(x, wq, wk, wv, wproj, bproj, *, num_heads,
                      q_tile=None, mxu_dtype=jnp.bfloat16):
    """Self-attention forward (context=None, mask=None, dropout=0).

    x: (b, n, dim).  wq/wk/wv/wproj: (dim, dim) stored as (in, out).
    bproj: (1, dim).  mxu_dtype: MXU operand dtype (bf16 default, f32 opt-in);
    accumulation and bias add stay f32.
    """
    b, n, dim = x.shape
    assert dim % num_heads == 0
    head_dim = dim // num_heads
    scale = head_dim ** -0.5

    # Fuse K and V projection weights (same input) into one (dim, 2*dim) matmul.
    wkv = jnp.concatenate([wk, wv], axis=1)

    compute_dtype = jnp.dtype(mxu_dtype) if mxu_dtype is not None else jnp.dtype(x.dtype)
    x_c = x.astype(compute_dtype)
    wq_c = wq.astype(compute_dtype)
    wkv_c = wkv.astype(compute_dtype)
    wp_c = wproj.astype(compute_dtype)
    bp_f32 = bproj.astype(jnp.float32)

    # Query tiling: per-step score tile is (H, q_tile, n) instead of (H, n, n).
    # (v6e: consider q_tile=256 when n % 256 == 0; keep 128 on v5e.)
    if q_tile is None:
        q_tile = min(n, 128)
        if n % q_tile != 0:
            q_tile = n
    assert n % q_tile == 0, "q_tile must divide the sequence length"
    num_q_tiles = n // q_tile

    kernel = functools.partial(_attention_kernel, num_heads=num_heads,
                               head_dim=head_dim, scale=scale, q_tile=q_tile)

    # Explicit scoped-VMEM budget from the block footprint (with headroom).
    cbytes = compute_dtype.itemsize
    obytes = jnp.dtype(x.dtype).itemsize
    vmem_bytes = (
        2 * n * dim * cbytes                      # x block (double buffered)
        + 4 * dim * dim * cbytes                  # Wq + Wkv + Wproj (single buffered)
        + 2 * dim * 4                             # bias (f32)
        + 2 * q_tile * dim * obytes               # output block (double buffered)
        + 2 * n * dim * cbytes                    # K/V scratch
        + 3 * num_heads * q_tile * n * 4          # score-tile temporaries (f32)
        + 4 * q_tile * dim * 4                    # q / merged / proj temporaries
    )
    vmem_limit = int(min(max(vmem_bytes * 3 // 2, 32 * 1024 * 1024),
                         100 * 1024 * 1024))

    def _const_spec(shape):
        # Weights/bias never change across the grid: single-buffer them so the
        # pipeline does not double their VMEM footprint (matters on v7x).
        index_map = lambda ib, iq: tuple(0 for _ in shape)
        try:
            return pl.BlockSpec(shape, index_map, pipeline_mode=pl.Buffered(1))
        except (AttributeError, TypeError):   # older API without pipeline_mode
            return pl.BlockSpec(shape, index_map)

    return pl.pallas_call(
        kernel,
        out_shape=jax.ShapeDtypeStruct((b, n, dim), x.dtype),
        grid=(b, num_q_tiles),
        in_specs=[
            pl.BlockSpec((1, n, dim), lambda ib, iq: (ib, 0, 0)),   # x (queries + K/V)
            _const_spec((dim, dim)),                                # Wq
            _const_spec((dim, 2 * dim)),                            # W[k|v] fused
            _const_spec((dim, dim)),                                # Wproj
            _const_spec((1, dim)),                                  # bproj (f32)
        ],
        out_specs=pl.BlockSpec((1, q_tile, dim), lambda ib, iq: (ib, iq, 0)),
        scratch_shapes=[pltpu.VMEM((2, num_heads, n, head_dim), compute_dtype)],
        compiler_params=pltpu.CompilerParams(
            # KV hoist forces the q-tile axis to "arbitrary"; batch stays
            # "parallel" so v7x's two TensorCores get independent work.
            dimension_semantics=("parallel", "arbitrary"),
            vmem_limit_bytes=vmem_limit),
    )(x_c, wq_c, wkv_c, wp_c, bp_f32)


def _reference_forward(x, wq, wk, wv, wproj, bproj, *, num_heads):
    """Pure-JAX reference mirroring the PyTorch module (dropout=0, mask=None)."""
    b, n, dim = x.shape
    head_dim = dim // num_heads
    scale = head_dim ** -0.5
    q = x @ wq
    k = x @ wk
    v = x @ wv

    def split(t):
        return t.reshape(b, n, num_heads, head_dim).transpose(0, 2, 1, 3)

    qh, kh, vh = split(q), split(k), split(v)
    dots = jnp.einsum('bhid,bhjd->bhij', qh, kh) * scale
    attn = jax.nn.softmax(dots, axis=-1)
    out = jnp.einsum('bhij,bhjd->bhid', attn, vh)
    out = out.transpose(0, 2, 1, 3).reshape(b, n, dim)
    return out @ wproj + bproj


if __name__ == "__main__":
    # Small shapes consistent with the module: dim=32, num_heads=4, seq=16, batch=2.
    b, n, dim, num_heads = 2, 16, 32, 4

    key = jax.random.PRNGKey(0)
    kx, kq, kk, kv, kp, kb = jax.random.split(key, 6)

    x = jax.random.normal(kx, (b, n, dim), dtype=jnp.float32)
    wq = jax.random.normal(kq, (dim, dim), dtype=jnp.float32) * 0.05
    wk = jax.random.normal(kk, (dim, dim), dtype=jnp.float32) * 0.05
    wv = jax.random.normal(kv, (dim, dim), dtype=jnp.float32) * 0.05
    wproj = jax.random.normal(kp, (dim, dim), dtype=jnp.float32) * 0.05
    bproj = jax.random.normal(kb, (1, dim), dtype=jnp.float32) * 0.05

    ref = _reference_forward(x, wq, wk, wv, wproj, bproj, num_heads=num_heads)

    # f32-operand path with 2 q tiles: exercises the pl.when KV hoist + scratch
    # reuse across q tiles; tight tolerance (approx reciprocal only).
    out_f32 = attention_forward(x, wq, wk, wv, wproj, bproj, num_heads=num_heads,
                                q_tile=8, mxu_dtype=jnp.float32)
    out_f32 = jax.block_until_ready(out_f32)
    assert out_f32.shape == (b, n, dim)
    assert jnp.allclose(out_f32, ref, atol=2e-3, rtol=2e-3), "f32 path mismatch"

    # Default path: bf16 MXU operands, f32 accumulation.
    out_bf16 = attention_forward(x, wq, wk, wv, wproj, bproj, num_heads=num_heads)
    out_bf16 = jax.block_until_ready(out_bf16)
    assert out_bf16.shape == (b, n, dim)
    assert jnp.allclose(out_bf16, ref, atol=3e-2, rtol=3e-2), "bf16 path mismatch"

    print("KERNEL_OK")
</pallas_src>

<mosaic_0001>
module attributes {stable_mosaic.version = 11 : i64} {
  func.func @_attention_kernel(%arg0: i32, %arg1: i32, %arg2: memref<1x16x32xf32, #tpu.memory_space<vmem>>, %arg3: memref<32x32xf32, #tpu.memory_space<vmem>>, %arg4: memref<32x64xf32, #tpu.memory_space<vmem>>, %arg5: memref<32x32xf32, #tpu.memory_space<vmem>>, %arg6: memref<1x32xf32, #tpu.memory_space<vmem>>, %arg7: memref<1x8x32xf32, #tpu.memory_space<vmem>>, %arg8: memref<2x4x16x8xf32, #tpu.memory_space<vmem>>) attributes {dimension_semantics = [#tpu.dimension_semantics<parallel>, #tpu.dimension_semantics<arbitrary>], iteration_bounds = array<i64: 2, 2>, scalar_prefetch = 0 : i64, scratch_operands = 1 : i64, tpu.core_type = #tpu.core_type<tc>, window_params = [{transform_indices = @transform_0, window_bounds = array<i64: 1, 16, 32>}, {pipeline_mode = #tpu.pipeline_mode<synchronous>, transform_indices = @transform_1, window_bounds = array<i64: 32, 32>}, {pipeline_mode = #tpu.pipeline_mode<synchronous>, transform_indices = @transform_2, window_bounds = array<i64: 32, 64>}, {pipeline_mode = #tpu.pipeline_mode<synchronous>, transform_indices = @transform_3, window_bounds = array<i64: 32, 32>}, {pipeline_mode = #tpu.pipeline_mode<synchronous>, transform_indices = @transform_4, window_bounds = array<i64: 1, 32>}, {transform_indices = @transform_5, window_bounds = array<i64: 1, 8, 32>}]} {
    %c0_i32 = arith.constant 0 : i32
    %0 = arith.cmpi eq, %arg1, %c0_i32 : i32
    %1 = arith.extui %0 : i1 to i32
    %c0_i32_0 = arith.constant 0 : i32
    %2 = arith.cmpi ne, %1, %c0_i32_0 : i32
    scf.if %2 {
      %c0_24 = arith.constant 0 : index
      %c0_25 = arith.constant 0 : index
      %c0_26 = arith.constant 0 : index
      %54 = vector.load %arg2[%c0_24, %c0_25, %c0_26] : memref<1x16x32xf32, #tpu.memory_space<vmem>>, vector<1x16x32xf32>
      %55 = vector.shape_cast %54 : vector<1x16x32xf32> to vector<16x32xf32>
      %c0_27 = arith.constant 0 : index
      %c0_28 = arith.constant 0 : index
      %56 = vector.load %arg4[%c0_27, %c0_28] : memref<32x64xf32, #tpu.memory_space<vmem>>, vector<32x64xf32>
      %cst_29 = arith.constant dense<0.000000e+00> : vector<16x64xf32>
      %57 = tpu.matmul %55, %56, %cst_29 {dimension_numbers = #tpu.dot_dimension_numbers<[1], [0], [0], [1], [0, 0, 1, 1], [], []>} : vector<16x32xf32>, vector<32x64xf32>, vector<16x64xf32> -> vector<16x64xf32>
      %58 = vector.extract_strided_slice %57 {offsets = [0, 0], sizes = [16, 8], strides = [1, 1]} : vector<16x64xf32> to vector<16x8xf32>
      %c0_30 = arith.constant 0 : index
      %c0_31 = arith.constant 0 : index
      %c0_32 = arith.constant 0 : index
      %c0_33 = arith.constant 0 : index
      %59 = vector.load %arg8[%c0_30, %c0_31, %c0_32, %c0_33] : memref<2x4x16x8xf32, #tpu.memory_space<vmem>>, vector<1x1x16x8xf32>
      %60 = vector.shape_cast %59 : vector<1x1x16x8xf32> to vector<16x8xf32>
      %61 = vector.shape_cast %58 : vector<16x8xf32> to vector<1x1x16x8xf32>
      tpu.vector_store %arg8[%c0_30, %c0_31, %c0_32, %c0_33], %61 {strides = array<i32>} : memref<2x4x16x8xf32, #tpu.memory_space<vmem>>, vector<1x1x16x8xf32>,
      %62 = vector.extract_strided_slice %57 {offsets = [0, 32], sizes = [16, 8], strides = [1, 1]} : vector<16x64xf32> to vector<16x8xf32>
      %c1_34 = arith.constant 1 : index
      %c0_35 = arith.constant 0 : index
      %c0_36 = arith.constant 0 : index
      %c0_37 = arith.constant 0 : index
      %63 = vector.load %arg8[%c1_34, %c0_35, %c0_36, %c0_37] : memref<2x4x16x8xf32, #tpu.memory_space<vmem>>, vector<1x1x16x8xf32>
      %64 = vector.shape_cast %63 : vector<1x1x16x8xf32> to vector<16x8xf32>
      %65 = vector.shape_cast %62 : vector<16x8xf32> to vector<1x1x16x8xf32>
      tpu.vector_store %arg8[%c1_34, %c0_35, %c0_36, %c0_37], %65 {strides = array<i32>} : memref<2x4x16x8xf32, #tpu.memory_space<vmem>>, vector<1x1x16x8xf32>,
      %66 = vector.extract_strided_slice %57 {offsets = [0, 8], sizes = [16, 8], strides = [1, 1]} : vector<16x64xf32> to vector<16x8xf32>
      %c0_38 = arith.constant 0 : index
      %c1_39 = arith.constant 1 : index
      %c0_40 = arith.constant 0 : index
      %c0_41 = arith.constant 0 : index
      %67 = vector.load %arg8[%c0_38, %c1_39, %c0_40, %c0_41] : memref<2x4x16x8xf32, #tpu.memory_space<vmem>>, vector<1x1x16x8xf32>
      %68 = vector.shape_cast %67 : vector<1x1x16x8xf32> to vector<16x8xf32>
      %69 = vector.shape_cast %66 : vector<16x8xf32> to vector<1x1x16x8xf32>
      tpu.vector_store %arg8[%c0_38, %c1_39, %c0_40, %c0_41], %69 {strides = array<i32>} : memref<2x4x16x8xf32, #tpu.memory_space<vmem>>, vector<1x1x16x8xf32>,
      %70 = vector.extract_strided_slice %57 {offsets = [0, 40], sizes = [16, 8], strides = [1, 1]} : vector<16x64xf32> to vector<16x8xf32>
      %c1_42 = arith.constant 1 : index
      %c1_43 = arith.constant 1 : index
      %c0_44 = arith.constant 0 : index
      %c0_45 = arith.constant 0 : index
      %71 = vector.load %arg8[%c1_42, %c1_43, %c0_44, %c0_45] : memref<2x4x16x8xf32, #tpu.memory_space<vmem>>, vector<1x1x16x8xf32>
      %72 = vector.shape_cast %71 : vector<1x1x16x8xf32> to vector<16x8xf32>
      %73 = vector.shape_cast %70 : vector<16x8xf32> to vector<1x1x16x8xf32>
      tpu.vector_store %arg8[%c1_42, %c1_43, %c0_44, %c0_45], %73 {strides = array<i32>} : memref<2x4x16x8xf32, #tpu.memory_space<vmem>>, vector<1x1x16x8xf32>,
      %74 = vector.extract_strided_slice %57 {offsets = [0, 16], sizes = [16, 8], strides = [1, 1]} : vector<16x64xf32> to vector<16x8xf32>
      %c0_46 = arith.constant 0 : index
      %c2 = arith.constant 2 : index
      %c0_47 = arith.constant 0 : index
      %c0_48 = arith.constant 0 : index
      %75 = vector.load %arg8[%c0_46, %c2, %c0_47, %c0_48] : memref<2x4x16x8xf32, #tpu.memory_space<vmem>>, vector<1x1x16x8xf32>
      %76 = vector.shape_cast %75 : vector<1x1x16x8xf32> to vector<16x8xf32>
      %77 = vector.shape_cast %74 : vector<16x8xf32> to vector<1x1x16x8xf32>
      tpu.vector_store %arg8[%c0_46, %c2, %c0_47, %c0_48], %77 {strides = array<i32>} : memref<2x4x16x8xf32, #tpu.memory_space<vmem>>, vector<1x1x16x8xf32>,
      %78 = vector.extract_strided_slice %57 {offsets = [0, 48], sizes = [16, 8], strides = [1, 1]} : vector<16x64xf32> to vector<16x8xf32>
      %c1_49 = arith.constant 1 : index
      %c2_50 = arith.constant 2 : index
      %c0_51 = arith.constant 0 : index
      %c0_52 = arith.constant 0 : index
      %79 = vector.load %arg8[%c1_49, %c2_50, %c0_51, %c0_52] : memref<2x4x16x8xf32, #tpu.memory_space<vmem>>, vector<1x1x16x8xf32>
      %80 = vector.shape_cast %79 : vector<1x1x16x8xf32> to vector<16x8xf32>
      %81 = vector.shape_cast %78 : vector<16x8xf32> to vector<1x1x16x8xf32>
      tpu.vector_store %arg8[%c1_49, %c2_50, %c0_51, %c0_52], %81 {strides = array<i32>} : memref<2x4x16x8xf32, #tpu.memory_space<vmem>>, vector<1x1x16x8xf32>,
      %82 = vector.extract_strided_slice %57 {offsets = [0, 24], sizes = [16, 8], strides = [1, 1]} : vector<16x64xf32> to vector<16x8xf32>
      %c0_53 = arith.constant 0 : index
      %c3 = arith.constant 3 : index
      %c0_54 = arith.constant 0 : index
      %c0_55 = arith.constant 0 : index
      %83 = vector.load %arg8[%c0_53, %c3, %c0_54, %c0_55] : memref<2x4x16x8xf32, #tpu.memory_space<vmem>>, vector<1x1x16x8xf32>
      %84 = vector.shape_cast %83 : vector<1x1x16x8xf32> to vector<16x8xf32>
      %85 = vector.shape_cast %82 : vector<16x8xf32> to vector<1x1x16x8xf32>
      tpu.vector_store %arg8[%c0_53, %c3, %c0_54, %c0_55], %85 {strides = array<i32>} : memref<2x4x16x8xf32, #tpu.memory_space<vmem>>, vector<1x1x16x8xf32>,
      %86 = vector.extract_strided_slice %57 {offsets = [0, 56], sizes = [16, 8], strides = [1, 1]} : vector<16x64xf32> to vector<16x8xf32>
      %c1_56 = arith.constant 1 : index
      %c3_57 = arith.constant 3 : index
      %c0_58 = arith.constant 0 : index
      %c0_59 = arith.constant 0 : index
      %87 = vector.load %arg8[%c1_56, %c3_57, %c0_58, %c0_59] : memref<2x4x16x8xf32, #tpu.memory_space<vmem>>, vector<1x1x16x8xf32>
      %88 = vector.shape_cast %87 : vector<1x1x16x8xf32> to vector<16x8xf32>
      %89 = vector.shape_cast %86 : vector<16x8xf32> to vector<1x1x16x8xf32>
      tpu.vector_store %arg8[%c1_56, %c3_57, %c0_58, %c0_59], %89 {strides = array<i32>} : memref<2x4x16x8xf32, #tpu.memory_space<vmem>>, vector<1x1x16x8xf32>,
    } else {
    }
    %c8_i32 = arith.constant 8 : i32
    %3 = arith.muli %arg1, %c8_i32 : i32
    %4 = tpu.assume_multiple %3, 8 : i32
    %c0 = arith.constant 0 : index
    %5 = arith.index_cast %4 : i32 to index
    %c0_1 = arith.constant 0 : index
    %6 = vector.load %arg2[%c0, %5, %c0_1] : memref<1x16x32xf32, #tpu.memory_space<vmem>>, vector<1x8x32xf32>
    %7 = vector.shape_cast %6 : vector<1x8x32xf32> to vector<8x32xf32>
    %c0_2 = arith.constant 0 : index
    %c0_3 = arith.constant 0 : index
    %8 = vector.load %arg3[%c0_2, %c0_3] : memref<32x32xf32, #tpu.memory_space<vmem>>, vector<32x32xf32>
    %cst = arith.constant dense<0.000000e+00> : vector<8x32xf32>
    %9 = tpu.matmul %7, %8, %cst {dimension_numbers = #tpu.dot_dimension_numbers<[1], [0], [0], [1], [0, 0, 1, 1], [], []>} : vector<8x32xf32>, vector<32x32xf32>, vector<8x32xf32> -> vector<8x32xf32>
    %cst_4 = arith.constant 0.353553385 : f32
    %10 = vector.broadcast %cst_4 : f32 to vector<8x32xf32>
    %11 = arith.mulf %9, %10 : vector<8x32xf32>
    %12 = vector.extract_strided_slice %11 {offsets = [0, 0], sizes = [8, 8], strides = [1, 1]} : vector<8x32xf32> to vector<8x8xf32>
    %13 = vector.extract_strided_slice %11 {offsets = [0, 8], sizes = [8, 8], strides = [1, 1]} : vector<8x32xf32> to vector<8x8xf32>
    %14 = vector.extract_strided_slice %11 {offsets = [0, 16], sizes = [8, 8], strides = [1, 1]} : vector<8x32xf32> to vector<8x8xf32>
    %15 = vector.extract_strided_slice %11 {offsets = [0, 24], sizes = [8, 8], strides = [1, 1]} : vector<8x32xf32> to vector<8x8xf32>
    %16 = vector.shape_cast %12 : vector<8x8xf32> to vector<1x8x8xf32>
    %17 = vector.shape_cast %13 : vector<8x8xf32> to vector<1x8x8xf32>
    %18 = vector.shape_cast %14 : vector<8x8xf32> to vector<1x8x8xf32>
    %19 = vector.shape_cast %15 : vector<8x8xf32> to vector<1x8x8xf32>
    %20 = tpu.concatenate %16, %17, %18, %19 in 0 : vector<1x8x8xf32>, vector<1x8x8xf32>, vector<1x8x8xf32>, vector<1x8x8xf32> -> vector<4x8x8xf32>
    %c0_5 = arith.constant 0 : index
    %c0_6 = arith.constant 0 : index
    %c0_7 = arith.constant 0 : index
    %c0_8 = arith.constant 0 : index
    %21 = vector.load %arg8[%c0_5, %c0_6, %c0_7, %c0_8] : memref<2x4x16x8xf32, #tpu.memory_space<vmem>>, vector<1x4x16x8xf32>
    %22 = vector.shape_cast %21 : vector<1x4x16x8xf32> to vector<4x16x8xf32>
    %c1 = arith.constant 1 : index
    %c0_9 = arith.constant 0 : index
    %c0_10 = arith.constant 0 : index
    %c0_11 = arith.constant 0 : index
    %23 = vector.load %arg8[%c1, %c0_9, %c0_10, %c0_11] : memref<2x4x16x8xf32, #tpu.memory_space<vmem>>, vector<1x4x16x8xf32>
    %24 = vector.shape_cast %23 : vector<1x4x16x8xf32> to vector<4x16x8xf32>
    "tpu.trace_start"() <{level = 10 : i32, message = "hqd,hkd->hqk"}> : () -> ()
    %cst_12 = arith.constant dense<0.000000e+00> : vector<4x8x16xf32>
    %25 = tpu.matmul %20, %22, %cst_12 {dimension_numbers = #tpu.dot_dimension_numbers<[2], [2], [1], [1], [0, 0, 0, 1, 1, 1], [0], [0]>} : vector<4x8x8xf32>, vector<4x16x8xf32>, vector<4x8x16xf32> -> vector<4x8x16xf32>
    "tpu.trace_stop"() : () -> ()
    %cst_13 = arith.constant dense<0xFF800000> : vector<4x8xf32>
    %26 = vector.multi_reduction <maximumf>, %25, %cst_13 [2] : vector<4x8x16xf32> to vector<4x8xf32>
    %27 = vector.shape_cast %26 : vector<4x8xf32> to vector<4x8x1xf32>
    %28 = vector.broadcast %27 : vector<4x8x1xf32> to vector<4x8x16xf32>
    %29 = arith.subf %25, %28 : vector<4x8x16xf32>
    %30 = math.exp %29 : vector<4x8x16xf32>
    %cst_14 = arith.constant dense<0.000000e+00> : vector<4x8xf32>
    %31 = vector.multi_reduction <add>, %30, %cst_14 [2] : vector<4x8x16xf32> to vector<4x8xf32>
    %32 = vector.shape_cast %31 : vector<4x8xf32> to vector<4x8x1xf32>
    "tpu.trace_start"() <{level = 10 : i32, message = "hqk,hkd->hqd"}> : () -> ()
    %cst_15 = arith.constant dense<0.000000e+00> : vector<4x8x8xf32>
    %33 = tpu.matmul %30, %24, %cst_15 {dimension_numbers = #tpu.dot_dimension_numbers<[2], [1], [1], [2], [0, 0, 0, 1, 1, 2], [0], [0]>} : vector<4x8x16xf32>, vector<4x16x8xf32>, vector<4x8x8xf32> -> vector<4x8x8xf32>
    "tpu.trace_stop"() : () -> ()
    %34 = tpu.reciprocal %32 {approx = true} : vector<4x8x1xf32> -> vector<4x8x1xf32>
    %35 = vector.broadcast %34 : vector<4x8x1xf32> to vector<4x8x8xf32>
    %36 = arith.mulf %33, %35 : vector<4x8x8xf32>
    %37 = vector.extract_strided_slice %36 {offsets = [0, 0, 0], sizes = [1, 8, 8], strides = [1, 1, 1]} : vector<4x8x8xf32> to vector<1x8x8xf32>
    %38 = vector.shape_cast %37 : vector<1x8x8xf32> to vector<8x8xf32>
    %39 = vector.extract_strided_slice %36 {offsets = [1, 0, 0], sizes = [1, 8, 8], strides = [1, 1, 1]} : vector<4x8x8xf32> to vector<1x8x8xf32>
    %40 = vector.shape_cast %39 : vector<1x8x8xf32> to vector<8x8xf32>
    %41 = vector.extract_strided_slice %36 {offsets = [2, 0, 0], sizes = [1, 8, 8], strides = [1, 1, 1]} : vector<4x8x8xf32> to vector<1x8x8xf32>
    %42 = vector.shape_cast %41 : vector<1x8x8xf32> to vector<8x8xf32>
    %43 = vector.extract_strided_slice %36 {offsets = [3, 0, 0], sizes = [1, 8, 8], strides = [1, 1, 1]} : vector<4x8x8xf32> to vector<1x8x8xf32>
    %44 = vector.shape_cast %43 : vector<1x8x8xf32> to vector<8x8xf32>
    %45 = tpu.concatenate %38, %40, %42, %44 in 1 : vector<8x8xf32>, vector<8x8xf32>, vector<8x8xf32>, vector<8x8xf32> -> vector<8x32xf32>
    %c0_16 = arith.constant 0 : index
    %c0_17 = arith.constant 0 : index
    %46 = vector.load %arg5[%c0_16, %c0_17] : memref<32x32xf32, #tpu.memory_space<vmem>>, vector<32x32xf32>
    %cst_18 = arith.constant dense<0.000000e+00> : vector<8x32xf32>
    %47 = tpu.matmul %45, %46, %cst_18 {dimension_numbers = #tpu.dot_dimension_numbers<[1], [0], [0], [1], [0, 0, 1, 1], [], []>} : vector<8x32xf32>, vector<32x32xf32>, vector<8x32xf32> -> vector<8x32xf32>
    %c0_19 = arith.constant 0 : index
    %c0_20 = arith.constant 0 : index
    %48 = vector.load %arg6[%c0_19, %c0_20] : memref<1x32xf32, #tpu.memory_space<vmem>>, vector<1x32xf32>
    %49 = vector.broadcast %48 : vector<1x32xf32> to vector<8x32xf32>
    %50 = arith.addf %47, %49 : vector<8x32xf32>
    %c0_21 = arith.constant 0 : index
    %c0_22 = arith.constant 0 : index
    %c0_23 = arith.constant 0 : index
    %51 = vector.load %arg7[%c0_21, %c0_22, %c0_23] : memref<1x8x32xf32, #tpu.memory_space<vmem>>, vector<1x8x32xf32>
    %52 = vector.shape_cast %51 : vector<1x8x32xf32> to vector<8x32xf32>
    %53 = vector.shape_cast %50 : vector<8x32xf32> to vector<1x8x32xf32>
    tpu.vector_store %arg7[%c0_21, %c0_22, %c0_23], %53 {strides = array<i32>} : memref<1x8x32xf32, #tpu.memory_space<vmem>>, vector<1x8x32xf32>,
    return
  }
  func.func @transform_0(%arg0: i32, %arg1: i32) -> (i32, i32, i32) {
    %c0_i32 = arith.constant 0 : i32
    %c0_i32_0 = arith.constant 0 : i32
    %c0_i32_1 = arith.constant 0 : i32
    return %arg0, %c0_i32, %c0_i32_0 : i32, i32, i32
  }
  func.func @transform_1(%arg0: i32, %arg1: i32) -> (i32, i32) {
    %c0_i32 = arith.constant 0 : i32
    %c0_i32_0 = arith.constant 0 : i32
    %c0_i32_1 = arith.constant 0 : i32
    return %c0_i32, %c0_i32_0 : i32, i32
  }
  func.func @transform_2(%arg0: i32, %arg1: i32) -> (i32, i32) {
    %c0_i32 = arith.constant 0 : i32
    %c0_i32_0 = arith.constant 0 : i32
    %c0_i32_1 = arith.constant 0 : i32
    return %c0_i32, %c0_i32_0 : i32, i32
  }
  func.func @transform_3(%arg0: i32, %arg1: i32) -> (i32, i32) {
    %c0_i32 = arith.constant 0 : i32
    %c0_i32_0 = arith.constant 0 : i32
    %c0_i32_1 = arith.constant 0 : i32
    return %c0_i32, %c0_i32_0 : i32, i32
  }
  func.func @transform_4(%arg0: i32, %arg1: i32) -> (i32, i32) {
    %c0_i32 = arith.constant 0 : i32
    %c0_i32_0 = arith.constant 0 : i32
    %c0_i32_1 = arith.constant 0 : i32
    return %c0_i32, %c0_i32_0 : i32, i32
  }
  func.func @transform_5(%arg0: i32, %arg1: i32) -> (i32, i32, i32) {
    %c0_i32 = arith.constant 0 : i32
    %c0_i32_0 = arith.constant 0 : i32
    return %arg0, %arg1, %c0_i32 : i32, i32, i32
  }
}

</mosaic_0001>

<llo_original>
// kernel: tpu_custom_call.1
$region0: #{tpu_custom_call.1}
  #allocation0 [shape = 'u32[]', space=smem, size = 0x4, offset = 0x4, fixed_abs, tag = 'smem constant byte address 0x4 - core index']
  #allocation1 [shape = 'u32[72,128]{1,0:T(1,128)}', space=vmem, size = 0x9000, scoped, tag = 'internal scratch']
  #allocation2 [shape = 'f32[2,4,16,8]{3,2,1,0:T(8,128)}', space=vmem, size = 0x10000, scoped, tag = 'scratch operand']
  %s0 = inlined_call_operand.hbm [shape: f32[2,16,32], index: 0, kind: input, shape index: {}]
  %s1 = inlined_call_operand.hbm [shape: f32[32,32], index: 1, kind: input, shape index: {}]
  %s2 = inlined_call_operand.hbm [shape: f32[32,64], index: 2, kind: input, shape index: {}]
  %s3 = inlined_call_operand.hbm [shape: f32[32,32], index: 3, kind: input, shape index: {}]
  %s4 = inlined_call_operand.vmem [shape: f32[1,32], index: 4, kind: input, shape index: {}]
  %s5 = inlined_call_operand.hbm [shape: f32[2,16,32], index: 5, kind: output, shape index: {}]
  %s6 = sld [smem:[#allocation0]]
  $region73: #{tpu_custom_call.1} parent=0
    _
  %s8 = ssub.s32 1, %s6
  %s9 = scalar_select 0, %s8, %s6
  $region1: #{tpu_custom_call.1} parent=0
    #allocation3 [shape = 'u8[16384]{0}', space=vmem, size = 0x4000, scoped, tag = 'input window, operand 0']
    #allocation4 [shape = 's32[2]{0}', space=sflag, size = 0x8, scoped, tag = 'scoped memory for tpu_custom_call.1']
    #allocation5 [shape = 's32[2]{0}', space=sflag, size = 0x8, scoped, tag = 'scoped memory for tpu_custom_call.1']
    #allocation6 [shape = 'u8[16384]{0}', space=vmem, size = 0x4000, scoped, tag = 'input window, operand 1, single buffered']
    #allocation7 [shape = 's32[1]{0}', space=sflag, size = 0x4, scoped, tag = 'scoped memory for tpu_custom_call.1']
    #allocation8 [shape = 'u8[16384]{0}', space=vmem, size = 0x4000, scoped, tag = 'input window, operand 2, single buffered']
    #allocation9 [shape = 'u8[16384]{0}', space=vmem, size = 0x4000, scoped, tag = 'input window, operand 3, single buffered']
    #allocation10 [shape = 's32[1]{0}', space=sflag, size = 0x4, scoped, tag = 'scoped memory for tpu_custom_call.1']
    #allocation11 [shape = 'u8[8192]{0}', space=vmem, size = 0x2000, scoped, tag = 'output window, operand 0']
    %10 = vsyncpa [#allocation4], 0
    %s11 = scalar_lea.sflag [#allocation4], 1
    %12 = vsyncpa %s11, 0
    %13 = vsyncpa [#allocation7], 0
    %14 = vsyncpa [#allocation10], 0
    %15 = vsyncpa [#allocation5], 0
    %s16 = scalar_lea.sflag [#allocation5], 1
    %17 = vsyncpa %s16, 0
    loop: start=0, step=1, limit=6
    $region2: #{tpu_custom_call.1} parent=1 // loop_pre_header
      _
    $region3: #{tpu_custom_call.1} parent=1 // loop_header
      %s19 = sphi 0, %s23
      %p20 = scmp.ge.s32.totalorder %s19, 6
      %s26 = sphi 0, %s38
      %s27 = sphi 0, %s34
      %s28 = sphi 0, %s26
      %s29 = sphi 0, %s27
      %s30 = sphi 0, %s28
      %s31 = sphi 0, %s29
      %s41 = sphi 0, %s43
      %s44 = sphi 0, %s41
      %s45 = sphi 0, %s44
      %s61 = sphi 0, %s45
      %s65 = sphi 0, %s65
      %s67 = sphi 0, %s65
      %s68 = sphi 0, %s67
      %s82 = sphi 0, %s68
      %s86 = sphi 0, %s86
      %s88 = sphi 0, %s86
      %s89 = sphi 0, %s88
      %s103 = sphi 0, %s89
      %s107 = sphi 0, %s107
      %s109 = sphi 0, %s107
      %s110 = sphi 0, %s109
      %s124 = sphi 0, %s110
      %s128 = sphi 0, %s128
      %s130 = sphi 0, %s128
      %s131 = sphi 0, %s130
      %s145 = sphi 0, %s131
      %s153 = sphi 0, %s155
      %s156 = sphi 0, %s153
      %s157 = sphi 0, %s156
      %s173 = sphi 0, %s157
    $region4: #{tpu_custom_call.1} parent=1 // loop_header_branch
      %22 = sbr.rel (%p20) target = $region8
    $region5: #{tpu_custom_call.1} parent=1 // loop_body
      %s24 = ssub.s32 %s19, 1
      %s25 = ssub.s32 %s19, 2
      %s32 = sadd.s32 1, %s27
      %p33 = scmp.ge.s32.totalorder %s32, 2
      %s34 = scalar_select %p33, 0, %s32
      %s35 = sadd.s32 1, %s26
      %s36 = scalar_select %p33, %s35, %s26
      %p37 = scmp.ge.s32.totalorder %s36, 2
      %s38 = scalar_select %p37, 0, %s36
      %s39 = ssub.s32 %s26, %s38
      %p40 = scmp.eq.s32.totalorder %s39, 0
      %s42 = sadd.s32 %s41, 1
      %s43 = scalar_select %p40, %s41, %s42
      %p46 = pneg %p40
      %p47 = scmp.eq.s32.totalorder %s19, 3
      %p48 = por %p46, %p47
      %p49 = scmp.ne.s32.totalorder %s41, %s44
      %p50 = scmp.eq.s32.totalorder %s19, 0
      %p51 = por %p49, %p50
      %p52 = scmp.ne.s32.totalorder %s41, %s44
      %p53 = scmp.eq.s32.totalorder %s24, 3
      %p54 = por %p52, %p53
      %p55 = scmp.ne.s32.totalorder %s44, %s45
      %p56 = scmp.eq.s32.totalorder %s24, 0
      %p57 = por %p55, %p56
      %p58 = scmp.ne.s32.totalorder %s44, %s45
      %p59 = scmp.eq.s32.totalorder %s25, 3
      %p60 = por %p58, %p59
      %p62 = scmp.ne.s32.totalorder %s45, %s61
      %p63 = scmp.eq.s32.totalorder %s25, 0
      %p64 = por %p62, %p63
      %s66 = sadd.s32 %s65, 1
      %p69 = scmp.eq.s32.totalorder %s19, 3
      %p70 = scmp.ne.s32.totalorder %s65, %s67
      %p71 = scmp.eq.s32.totalorder %s19, 0
      %p72 = por %p70, %p71
      %p73 = scmp.ne.s32.totalorder %s65, %s67
      %p74 = scmp.eq.s32.totalorder %s24, 3
      %p75 = por %p73, %p74
      %p76 = scmp.ne.s32.totalorder %s67, %s68
      %p77 = scmp.eq.s32.totalorder %s24, 0
      %p78 = por %p76, %p77
      %p79 = scmp.ne.s32.totalorder %s67, %s68
      %p80 = scmp.eq.s32.totalorder %s25, 3
      %p81 = por %p79, %p80
      %p83 = scmp.ne.s32.totalorder %s68, %s82
      %p84 = scmp.eq.s32.totalorder %s25, 0
      %p85 = por %p83, %p84
      %s87 = sadd.s32 %s86, 1
      %p90 = scmp.eq.s32.totalorder %s19, 3
      %p91 = scmp.ne.s32.totalorder %s86, %s88
      %p92 = scmp.eq.s32.totalorder %s19, 0
      %p93 = por %p91, %p92
      %p94 = scmp.ne.s32.totalorder %s86, %s88
      %p95 = scmp.eq.s32.totalorder %s24, 3
      %p96 = por %p94, %p95
      %p97 = scmp.ne.s32.totalorder %s88, %s89
      %p98 = scmp.eq.s32.totalorder %s24, 0
      %p99 = por %p97, %p98
      %p100 = scmp.ne.s32.totalorder %s88, %s89
      %p101 = scmp.eq.s32.totalorder %s25, 3
      %p102 = por %p100, %p101
      %p104 = scmp.ne.s32.totalorder %s89, %s103
      %p105 = scmp.eq.s32.totalorder %s25, 0
      %p106 = por %p104, %p105
      %s108 = sadd.s32 %s107, 1
      %p111 = scmp.eq.s32.totalorder %s19, 3
      %p112 = scmp.ne.s32.totalorder %s107, %s109
      %p113 = scmp.eq.s32.totalorder %s19, 0
      %p114 = por %p112, %p113
      %p115 = scmp.ne.s32.totalorder %s107, %s109
      %p116 = scmp.eq.s32.totalorder %s24, 3
      %p117 = por %p115, %p116
      %p118 = scmp.ne.s32.totalorder %s109, %s110
      %p119 = scmp.eq.s32.totalorder %s24, 0
      %p120 = por %p118, %p119
      %p121 = scmp.ne.s32.totalorder %s109, %s110
      %p122 = scmp.eq.s32.totalorder %s25, 3
      %p123 = por %p121, %p122
      %p125 = scmp.ne.s32.totalorder %s110, %s124
      %p126 = scmp.eq.s32.totalorder %s25, 0
      %p127 = por %p125, %p126
      %s129 = sadd.s32 %s128, 1
      %p132 = scmp.eq.s32.totalorder %s19, 3
      %p133 = scmp.ne.s32.totalorder %s128, %s130
      %p134 = scmp.eq.s32.totalorder %s19, 0
      %p135 = por %p133, %p134
      %p136 = scmp.ne.s32.totalorder %s128, %s130
      %p137 = scmp.eq.s32.totalorder %s24, 3
      %p138 = por %p136, %p137
      %p139 = scmp.ne.s32.totalorder %s130, %s131
      %p140 = scmp.eq.s32.totalorder %s24, 0
      %p141 = por %p139, %p140
      %p142 = scmp.ne.s32.totalorder %s130, %s131
      %p143 = scmp.eq.s32.totalorder %s25, 3
      %p144 = por %p142, %p143
      %p146 = scmp.ne.s32.totalorder %s131, %s145
      %p147 = scmp.eq.s32.totalorder %s25, 0
      %p148 = por %p146, %p147
      %s149 = ssub.s32 %s26, %s38
      %s150 = ssub.s32 %s27, %s34
      %s151 = sor.u32 %s149, %s150
      %p152 = scmp.eq.s32.totalorder %s151, 0
      %s154 = sadd.s32 %s153, 1
      %s155 = scalar_select %p152, %s153, %s154
      %p158 = pneg %p152
      %p159 = scmp.eq.s32.totalorder %s19, 3
      %p160 = por %p158, %p159
      %p161 = scmp.ne.s32.totalorder %s153, %s156
      %p162 = scmp.eq.s32.totalorder %s19, 0
      %p163 = por %p161, %p162
      %p164 = scmp.ne.s32.totalorder %s153, %s156
      %p165 = scmp.eq.s32.totalorder %s24, 3
      %p166 = por %p164, %p165
      %p167 = scmp.ne.s32.totalorder %s156, %s157
      %p168 = scmp.eq.s32.totalorder %s24, 0
      %p169 = por %p167, %p168
      %p170 = scmp.ne.s32.totalorder %s156, %s157
      %p171 = scmp.eq.s32.totalorder %s25, 3
      %p172 = por %p170, %p171
      %p174 = scmp.ne.s32.totalorder %s157, %s173
      %p175 = scmp.eq.s32.totalorder %s25, 0
      %p176 = por %p174, %p175
      %p177 = scmp.le.s32.totalorder 1, %s19
      %p178 = scmp.lt.s32.totalorder %s19, 5
      %p179 = pnand %p177, %p178
      %p180 = pneg %p179
      // Predicated region
      $region9: #{tpu_custom_call.1} parent=5 // pred_check
        _
      $region10: #{tpu_custom_call.1} parent=5 // pred_check_branch
        %182 = sbr.rel (%p179) target = $region12
      $region11: #{tpu_custom_call.1} parent=5 // pred_region
        %s183 = ssub.s32 %s19, 1
        // Predicated region
        $region13: #{tpu_custom_call.1} parent=11 // pred_check
          %p184 = pneg %p78
        $region14: #{tpu_custom_call.1} parent=11 // pred_check_branch
          %186 = sbr.rel (%p184) target = $region16
        $region15: #{tpu_custom_call.1} parent=11 // pred_region
          %188 = vsyncadd [#allocation7], 0
          %s189 = sshll.u32 %s1, 4
          %s190 = int_to_ptr.hbm [resolvable:$true] %s189
          %s191 = sshll.u32 [#allocation6], 4
          %s192 = int_to_ptr.vmem [resolvable:$true] %s191
          %197 = dma.hbm_to_vmem [thread:$0]  %s190, 512, %s192, [#allocation7], 128, 128, 8
        $region16: #{tpu_custom_call.1} parent=11 // pred_fallthru
          _
        // Predicated region
        $region17: #{tpu_custom_call.1} parent=11 // pred_check
          %p198 = pneg %p99
        $region18: #{tpu_custom_call.1} parent=11 // pred_check_branch
          %200 = sbr.rel (%p198) target = $region20
        $region19: #{tpu_custom_call.1} parent=11 // pred_region
          %202 = vsyncadd [#allocation7], 0
          %s203 = sshll.u32 %s2, 4
          %s204 = int_to_ptr.hbm [resolvable:$true] %s203
          %s205 = sshll.u32 [#allocation8], 4
          %s206 = int_to_ptr.vmem [resolvable:$true] %s205
          %211 = dma.hbm_to_vmem [thread:$0]  %s204, 512, %s206, [#allocation7], 128, 128, 8
        $region20: #{tpu_custom_call.1} parent=11 // pred_fallthru
          _
        // Predicated region
        $region21: #{tpu_custom_call.1} parent=11 // pred_check
          %p212 = pneg %p120
        $region22: #{tpu_custom_call.1} parent=11 // pred_check_branch
          %214 = sbr.rel (%p212) target = $region24
        $region23: #{tpu_custom_call.1} parent=11 // pred_region
          %216 = vsyncadd [#allocation10], 0
          %s217 = sshll.u32 %s3, 4
          %s218 = int_to_ptr.hbm [resolvable:$true] %s217
          %s219 = sshll.u32 [#allocation9], 4
          %s220 = int_to_ptr.vmem [resolvable:$true] %s219
          %225 = dma.hbm_to_vmem [thread:$0]  %s218, 512, %s220, [#allocation10], 128, 128, 8
        $region24: #{tpu_custom_call.1} parent=11 // pred_fallthru
          _
        // Predicated region
        $region25: #{tpu_custom_call.1} parent=11 // pred_check
          %p226 = pneg %p141
        $region26: #{tpu_custom_call.1} parent=11 // pred_check_branch
          %228 = sbr.rel (%p226) target = $region28
        $region27: #{tpu_custom_call.1} parent=11 // pred_region
          _
        $region28: #{tpu_custom_call.1} parent=11 // pred_fallthru
          _
      $region12: #{tpu_custom_call.1} parent=5 // pred_fallthru
        _
      %p229 = scmp.lt.s32.totalorder %s19, 4
      // Predicated region
      $region29: #{tpu_custom_call.1} parent=5 // pred_check
        %p230 = pneg %p229
      $region30: #{tpu_custom_call.1} parent=5 // pred_check_branch
        %232 = sbr.rel (%p230) target = $region32
      $region31: #{tpu_custom_call.1} parent=5 // pred_region
        // Predicated region
        $region33: #{tpu_custom_call.1} parent=31 // pred_check
          %p233 = pneg %p51
        $region34: #{tpu_custom_call.1} parent=31 // pred_check_branch
          %235 = sbr.rel (%p233) target = $region36
        $region35: #{tpu_custom_call.1} parent=31 // pred_region
          %s236 = sand.u32 %s41, 1
          %s237 = scalar_lea.sflag [#allocation4], %s236
          %s238 = sand.u32 %s41, 1
          %s239 = smul.addr %s238, 16
          %s240 = scalar_lea.vmem [#allocation3], %s239
          %242 = vsyncadd %s237, 0
          %s243 = smul.addr %s26, 2
          %s244 = smul.addr %s243, 8
          %s245 = scalar_lea.hbm %s0, %s244
          %s246 = sshll.u32 %s245, 4
          %s247 = int_to_ptr.hbm [resolvable:$true] %s246
          %s248 = sshll.u32 %s240, 4
          %s249 = int_to_ptr.vmem [resolvable:$true] %s248
          %254 = dma.hbm_to_vmem [thread:$0]  %s247, 256, %s249, %s237, 128, 128, 8
        $region36: #{tpu_custom_call.1} parent=31 // pred_fallthru
          _
      $region32: #{tpu_custom_call.1} parent=5 // pred_fallthru
        _
      %p255 = scmp.le.s32.totalorder 1, %s19
      %p256 = scmp.lt.s32.totalorder %s19, 5
      %p257 = pnand %p255, %p256
      %p258 = pneg %p257
      // Predicated region
      $region37: #{tpu_custom_call.1} parent=5 // pred_check
        _
      $region38: #{tpu_custom_call.1} parent=5 // pred_check_branch
        %260 = sbr.rel (%p257) target = $region40
      $region39: #{tpu_custom_call.1} parent=5 // pred_region
        %s261 = ssub.s32 %s19, 1
        %s262 = sand.u32 %s44, 1
        %s263 = scalar_lea.sflag [#allocation4], %s262
        %s264 = sand.u32 %s44, 1
        %s265 = smul.addr %s264, 16
        %s266 = scalar_lea.vmem [#allocation3], %s265
        // Predicated region
        $region41: #{tpu_custom_call.1} parent=39 // pred_check
          %p267 = pneg %p57
        $region42: #{tpu_custom_call.1} parent=39 // pred_check_branch
          %269 = sbr.rel (%p267) target = $region44
        $region43: #{tpu_custom_call.1} parent=39 // pred_region
          %271 = dma.done %s263, 256
        $region44: #{tpu_custom_call.1} parent=39 // pred_fallthru
          _
        // Predicated region
        $region45: #{tpu_custom_call.1} parent=39 // pred_check
          %p272 = pneg %p78
        $region46: #{tpu_custom_call.1} parent=39 // pred_check_branch
          %274 = sbr.rel (%p272) target = $region48
        $region47: #{tpu_custom_call.1} parent=39 // pred_region
          %276 = dma.done [#allocation7], 512
        $region48: #{tpu_custom_call.1} parent=39 // pred_fallthru
          _
        // Predicated region
        $region49: #{tpu_custom_call.1} parent=39 // pred_check
          %p277 = pneg %p99
        $region50: #{tpu_custom_call.1} parent=39 // pred_check_branch
          %279 = sbr.rel (%p277) target = $region52
        $region51: #{tpu_custom_call.1} parent=39 // pred_region
          %281 = dma.done [#allocation7], 512
        $region52: #{tpu_custom_call.1} parent=39 // pred_fallthru
          _
        // Predicated region
        $region53: #{tpu_custom_call.1} parent=39 // pred_check
          %p282 = pneg %p120
        $region54: #{tpu_custom_call.1} parent=39 // pred_check_branch
          %284 = sbr.rel (%p282) target = $region56
        $region55: #{tpu_custom_call.1} parent=39 // pred_region
          %286 = dma.done [#allocation10], 512
        $region56: #{tpu_custom_call.1} parent=39 // pred_fallthru
          _
        %s287 = sand.u32 %s44, 1
        %s288 = scalar_lea.sflag [#allocation4], %s287
        %s289 = sand.u32 %s44, 1
        %s290 = smul.addr %s289, 16
        %s291 = scalar_lea.vmem [#allocation3], %s290
        %p292 = pneg %p57
        %p293 = pneg %p54
        %p294 = pneg %p78
        %p295 = pneg %p75
        %p296 = pneg %p99
        %p297 = pneg %p96
        %p298 = pneg %p120
        %p299 = pneg %p117
        %p300 = pneg %p141
        %p301 = pneg %p138
        %p302 = pneg %p169
        %p303 = pneg %p166
        %s304 = sand.u32 %s156, 1
        %s305 = scalar_lea.sflag [#allocation5], %s304
        %s306 = sand.u32 %s156, 1
        %s307 = smul.addr %s306, 8
        %s308 = scalar_lea.vmem [#allocation11], %s307
        %p309 = scmp.eq.s32.totalorder %s29, 0
        // Predicated region
        $region57: #{tpu_custom_call.1} parent=39 // pred_check
          %p310 = pneg %p309
        $region58: #{tpu_custom_call.1} parent=39 // pred_check_branch
          %312 = sbr.rel (%p310) target = $region60
        $region59: #{tpu_custom_call.1} parent=39 // pred_region
          %v313 = vld [vmem:[%s266] sm:$0xff]
          %v314 = vld [vmem:[%s266 + $0x8] sm:$0xff]
          %v315 = vld [vmem:[#allocation8] sm:$0xff]
          %v316 = vld [vmem:[#allocation8 + $0x8] sm:$0xff]
          %v317 = vld [vmem:[#allocation8 + $0x10] sm:$0xff]
          %v318 = vld [vmem:[#allocation8 + $0x18] sm:$0xff]
          %vm319 = vcmask 261120
          %v321 = vsel %vm319, %v313, 0
          %v324 = vsel %vm319, %v314, 0
          %326 = vmatpush.msra.mxu0 0.0
          %327 = vmatpush.msra.mxu0 0.0
          %328 = vmatpush.msra.mxu0 0.0
          %329 = vmatpush.msra.mxu0 0.0
          %330 = vmatpush.msra.mxu0 0.0
          %331 = vmatpush.msra.mxu0 0.0
          %332 = vmatpush.msra.mxu0 0.0
          %333 = vmatpush.msra.mxu0 0.0
          %334 = vmatpush.msra.mxu0 0.0
          %335 = vmatpush.msra.mxu0 0.0
          %336 = vmatpush.msra.mxu0 0.0
          %337 = vmatpush.msra.mxu0 0.0
          %338 = vmatpush.msra.mxu0 %v318
          %339 = vmatpush.msra.mxu0 %v317
          %340 = vmatpush.msra.mxu0 %v316
          %341 = vmatpush.msra.mxu0 %v315
          %342 = vmatmul.f32.gmra.mxu0 %v321
          %v343 = vpop.f32.mrf.mxu0
          %v344 = vadd.f32 0.0, %v343
          %345 = vmatmul.f32.gmra.mxu0 %v324
          %v346 = vpop.f32.mrf.mxu0
          %v347 = vadd.f32 0.0, %v346
          %348 = vdwg.mxu0
          %vm349 = vcmask 64512
          %350 = vst.msk [vmem:[#allocation2] sm:$0xff] %vm349, %v344
          %351 = vst.msk [vmem:[#allocation2 + $0x8] sm:$0xff] %vm349, %v347
          %354 = vrot.lane.b32.xlu0 %v344, 96
          %v355 = vpop.permute.xlu0 %354
          %356 = vrot.lane.b32.xlu0 %v347, 96
          %v357 = vpop.permute.xlu0 %356
          %s360 = scalar_lea.vmem [#allocation2], 64
          %361 = vst.msk [vmem:[%s360] sm:$0xff] %vm349, %v355
          %362 = vst.msk [vmem:[%s360 + $0x8] sm:$0xff] %vm349, %v357
          %363 = vrot.lane.b32.xlu0 %v344, 120
          %v364 = vpop.permute.xlu0 %363
          %365 = vrot.lane.b32.xlu0 %v347, 120
          %v366 = vpop.permute.xlu0 %365
          %s369 = scalar_lea.vmem [#allocation2], 16
          %370 = vst.msk [vmem:[%s369] sm:$0xff] %vm349, %v364
          %371 = vst.msk [vmem:[%s369 + $0x8] sm:$0xff] %vm349, %v366
          %372 = vrot.lane.b32.xlu0 %v344, 88
          %v373 = vpop.permute.xlu0 %372
          %374 = vrot.lane.b32.xlu0 %v347, 88
          %v375 = vpop.permute.xlu0 %374
          %s378 = scalar_lea.vmem [#allocation2], 80
          %379 = vst.msk [vmem:[%s378] sm:$0xff] %vm349, %v373
          %380 = vst.msk [vmem:[%s378 + $0x8] sm:$0xff] %vm349, %v375
          %381 = vrot.lane.b32.xlu0 %v344, 112
          %v382 = vpop.permute.xlu0 %381
          %383 = vrot.lane.b32.xlu0 %v347, 112
          %v384 = vpop.permute.xlu0 %383
          %s387 = scalar_lea.vmem [#allocation2], 32
          %388 = vst.msk [vmem:[%s387] sm:$0xff] %vm349, %v382
          %389 = vst.msk [vmem:[%s387 + $0x8] sm:$0xff] %vm349, %v384
          %390 = vrot.lane.b32.xlu0 %v344, 80
          %v391 = vpop.permute.xlu0 %390
          %392 = vrot.lane.b32.xlu0 %v347, 80
          %v393 = vpop.permute.xlu0 %392
          %s396 = scalar_lea.vmem [#allocation2], 96
          %397 = vst.msk [vmem:[%s396] sm:$0xff] %vm349, %v391
          %398 = vst.msk [vmem:[%s396 + $0x8] sm:$0xff] %vm349, %v393
          %399 = vrot.lane.b32.xlu0 %v344, 104
          %v400 = vpop.permute.xlu0 %399
          %401 = vrot.lane.b32.xlu0 %v347, 104
          %v402 = vpop.permute.xlu0 %401
          %s405 = scalar_lea.vmem [#allocation2], 48
          %406 = vst.msk [vmem:[%s405] sm:$0xff] %vm349, %v400
          %407 = vst.msk [vmem:[%s405 + $0x8] sm:$0xff] %vm349, %v402
          %408 = vrot.lane.b32.xlu0 %v344, 72
          %v409 = vpop.permute.xlu0 %408
          %410 = vrot.lane.b32.xlu0 %v347, 72
          %v411 = vpop.permute.xlu0 %410
          %s414 = scalar_lea.vmem [#allocation2], 112
          %415 = vst.msk [vmem:[%s414] sm:$0xff] %vm349, %v409
          %416 = vst.msk [vmem:[%s414 + $0x8] sm:$0xff] %vm349, %v411
        $region60: #{tpu_custom_call.1} parent=39 // pred_fallthru
          _
        %s417 = smul.u32 %s29, 8
        %s418 = scalar_lea.vmem %s266, %s417 [#allocation3]
        %v419 = vld [vmem:[%s418] sm:$0xff]
        %v420 = vld [vmem:[#allocation6] sm:$0xff]
        %v421 = vld [vmem:[#allocation6 + $0x8] sm:$0xff]
        %v422 = vld [vmem:[#allocation6 + $0x10] sm:$0xff]
        %v423 = vld [vmem:[#allocation6 + $0x18] sm:$0xff]
        %vm424 = vcmask 261120
        %v426 = vsel %vm424, %v419, 0
        %428 = vmatpush.msra.mxu0 0.0
        %429 = vmatpush.msra.mxu0 0.0
        %430 = vmatpush.msra.mxu0 0.0
        %431 = vmatpush.msra.mxu0 0.0
        %432 = vmatpush.msra.mxu0 0.0
        %433 = vmatpush.msra.mxu0 0.0
        %434 = vmatpush.msra.mxu0 0.0
        %435 = vmatpush.msra.mxu0 0.0
        %436 = vmatpush.msra.mxu0 0.0
        %437 = vmatpush.msra.mxu0 0.0
        %438 = vmatpush.msra.mxu0 0.0
        %439 = vmatpush.msra.mxu0 0.0
        %440 = vmatpush.msra.mxu0 %v423
        %441 = vmatpush.msra.mxu0 %v422
        %442 = vmatpush.msra.mxu0 %v421
        %443 = vmatpush.msra.mxu0 %v420
        %444 = vmatmul.f32.gmra.mxu0 %v426
        %v445 = vpop.f32.mrf.mxu0
        %v446 = vadd.f32 0.0, %v445
        %447 = vdwg.mxu0
        %v448 = vmul.f32 %v446, 0.35355338
        %450 = vrot.lane.b32.xlu0 %v448, 120
        %v451 = vpop.permute.xlu0 %450
        %452 = vrot.lane.b32.xlu0 %v448, 112
        %v453 = vpop.permute.xlu0 %452
        %454 = vrot.lane.b32.xlu0 %v448, 104
        %v455 = vpop.permute.xlu0 %454
        %v456 = vld [vmem:[#allocation2] sm:$0xff]
        %v457 = vld [vmem:[#allocation2 + $0x8] sm:$0xff]
        %v458 = vld [vmem:[#allocation2 + $0x10] sm:$0xff]
        %v459 = vld [vmem:[#allocation2 + $0x18] sm:$0xff]
        %v460 = vld [vmem:[#allocation2 + $0x20] sm:$0xff]
        %v461 = vld [vmem:[#allocation2 + $0x28] sm:$0xff]
        %v462 = vld [vmem:[#allocation2 + $0x30] sm:$0xff]
        %v463 = vld [vmem:[#allocation2 + $0x38] sm:$0xff]
        %s464 = scalar_lea.vmem [#allocation2], 64
        %v465 = vld [vmem:[%s464] sm:$0xff]
        %v466 = vld [vmem:[%s464 + $0x8] sm:$0xff]
        %v467 = vld [vmem:[%s464 + $0x10] sm:$0xff]
        %v468 = vld [vmem:[%s464 + $0x18] sm:$0xff]
        %v469 = vld [vmem:[%s464 + $0x20] sm:$0xff]
        %v470 = vld [vmem:[%s464 + $0x28] sm:$0xff]
        %v471 = vld [vmem:[%s464 + $0x30] sm:$0xff]
        %v472 = vld [vmem:[%s464 + $0x38] sm:$0xff]
        %vm473 = vcmask 64512
        %v474 = vsel %vm473, %v448, 0
        %v477 = vsel %vm473, %v456, 0
        %v480 = vsel %vm473, %v457, 0
        %482 = vmatpush.xpose.msra.mxu0 0.0
        %483 = vmatpush.xpose.msra.mxu0 0.0
        %484 = vmatpush.xpose.msra.mxu0 0.0
        %485 = vmatpush.xpose.msra.mxu0 0.0
        %486 = vmatpush.xpose.msra.mxu0 0.0
        %487 = vmatpush.xpose.msra.mxu0 0.0
        %488 = vmatpush.xpose.msra.mxu0 0.0
        %489 = vmatpush.xpose.msra.mxu0 0.0
        %490 = vmatpush.xpose.msra.mxu0 0.0
        %491 = vmatpush.xpose.msra.mxu0 0.0
        %492 = vmatpush.xpose.msra.mxu0 0.0
        %493 = vmatpush.xpose.msra.mxu0 0.0
        %494 = vmatpush.xpose.msra.mxu0 0.0
        %495 = vmatpush.xpose.msra.mxu0 0.0
        %496 = vmatpush.xpose.msra.mxu0 %v480
        %497 = vmatpush.xpose.msra.mxu0 %v477
        %498 = vmatmul.f32.gmra.mxu0 %v474
        %v499 = vpop.f32.mrf.mxu0
        %v500 = vadd.f32 0.0, %v499
        %501 = vdwg.mxu0
        %v502 = vsel %vm473, %v451, 0
        %v505 = vsel %vm473, %v458, 0
        %v508 = vsel %vm473, %v459, 0
        %510 = vmatpush.xpose.msra.mxu0 0.0
        %511 = vmatpush.xpose.msra.mxu0 0.0
        %512 = vmatpush.xpose.msra.mxu0 0.0
        %513 = vmatpush.xpose.msra.mxu0 0.0
        %514 = vmatpush.xpose.msra.mxu0 0.0
        %515 = vmatpush.xpose.msra.mxu0 0.0
        %516 = vmatpush.xpose.msra.mxu0 0.0
        %517 = vmatpush.xpose.msra.mxu0 0.0
        %518 = vmatpush.xpose.msra.mxu0 0.0
        %519 = vmatpush.xpose.msra.mxu0 0.0
        %520 = vmatpush.xpose.msra.mxu0 0.0
        %521 = vmatpush.xpose.msra.mxu0 0.0
        %522 = vmatpush.xpose.msra.mxu0 0.0
        %523 = vmatpush.xpose.msra.mxu0 0.0
        %524 = vmatpush.xpose.msra.mxu0 %v508
        %525 = vmatpush.xpose.msra.mxu0 %v505
        %526 = vmatmul.f32.gmra.mxu0 %v502
        %v527 = vpop.f32.mrf.mxu0
        %v528 = vadd.f32 0.0, %v527
        %529 = vdwg.mxu0
        %v530 = vsel %vm473, %v453, 0
        %v533 = vsel %vm473, %v460, 0
        %v536 = vsel %vm473, %v461, 0
        %538 = vmatpush.xpose.msra.mxu0 0.0
        %539 = vmatpush.xpose.msra.mxu0 0.0
        %540 = vmatpush.xpose.msra.mxu0 0.0
        %541 = vmatpush.xpose.msra.mxu0 0.0
        %542 = vmatpush.xpose.msra.mxu0 0.0
        %543 = vmatpush.xpose.msra.mxu0 0.0
        %544 = vmatpush.xpose.msra.mxu0 0.0
        %545 = vmatpush.xpose.msra.mxu0 0.0
        %546 = vmatpush.xpose.msra.mxu0 0.0
        %547 = vmatpush.xpose.msra.mxu0 0.0
        %548 = vmatpush.xpose.msra.mxu0 0.0
        %549 = vmatpush.xpose.msra.mxu0 0.0
        %550 = vmatpush.xpose.msra.mxu0 0.0
        %551 = vmatpush.xpose.msra.mxu0 0.0
        %552 = vmatpush.xpose.msra.mxu0 %v536
        %553 = vmatpush.xpose.msra.mxu0 %v533
        %554 = vmatmul.f32.gmra.mxu0 %v530
        %v555 = vpop.f32.mrf.mxu0
        %v556 = vadd.f32 0.0, %v555
        %557 = vdwg.mxu0
        %v558 = vsel %vm473, %v455, 0
        %v561 = vsel %vm473, %v462, 0
        %v564 = vsel %vm473, %v463, 0
        %566 = vmatpush.xpose.msra.mxu0 0.0
        %567 = vmatpush.xpose.msra.mxu0 0.0
        %568 = vmatpush.xpose.msra.mxu0 0.0
        %569 = vmatpush.xpose.msra.mxu0 0.0
        %570 = vmatpush.xpose.msra.mxu0 0.0
        %571 = vmatpush.xpose.msra.mxu0 0.0
        %572 = vmatpush.xpose.msra.mxu0 0.0
        %573 = vmatpush.xpose.msra.mxu0 0.0
        %574 = vmatpush.xpose.msra.mxu0 0.0
        %575 = vmatpush.xpose.msra.mxu0 0.0
        %576 = vmatpush.xpose.msra.mxu0 0.0
        %577 = vmatpush.xpose.msra.mxu0 0.0
        %578 = vmatpush.xpose.msra.mxu0 0.0
        %579 = vmatpush.xpose.msra.mxu0 0.0
        %580 = vmatpush.xpose.msra.mxu0 %v564
        %581 = vmatpush.xpose.msra.mxu0 %v561
        %582 = vmatmul.f32.gmra.mxu0 %v558
        %v583 = vpop.f32.mrf.mxu0
        %v584 = vadd.f32 0.0, %v583
        %585 = vdwg.mxu0
        %vm586 = vcmask 130048
        %v587 = vsel %vm586, %v500, -inf
        %588 = vmax.xlane.f32.xlu0 %v587
        %v589 = vpop.xlane.xlu0 %588
        %v590 = vsel %vm586, %v528, -inf
        %591 = vmax.xlane.f32.xlu0 %v590
        %v592 = vpop.xlane.xlu0 %591
        %v593 = vsel %vm586, %v556, -inf
        %594 = vmax.xlane.f32.xlu0 %v593
        %v595 = vpop.xlane.xlu0 %594
        %v596 = vsel %vm586, %v584, -inf
        %597 = vmax.xlane.f32.xlu0 %v596
        %v598 = vpop.xlane.xlu0 %597
        %v599 = vsub.f32 %v500, %v589
        %v600 = vsub.f32 %v528, %v592
        %v601 = vsub.f32 %v556, %v595
        %v602 = vsub.f32 %v584, %v598
        %v603 = vmul.f32 %v599, 1.442695
        %v604 = vpow.pop %v603
        %v605 = vmul.f32 %v600, 1.442695
        %v606 = vpow.pop %v605
        %v607 = vmul.f32 %v601, 1.442695
        %v608 = vpow.pop %v607
        %v609 = vmul.f32 %v602, 1.442695
        %v610 = vpow.pop %v609
        %v611 = vsel %vm586, %v604, 0.0
        %612 = vadd.xlane.f32.xlu0 %v611
        %v613 = vpop.xlane.xlu0 %612
        %v614 = vsel %vm586, %v606, 0.0
        %615 = vadd.xlane.f32.xlu0 %v614
        %v616 = vpop.xlane.xlu0 %615
        %v617 = vsel %vm586, %v608, 0.0
        %618 = vadd.xlane.f32.xlu0 %v617
        %v619 = vpop.xlane.xlu0 %618
        %v620 = vsel %vm586, %v610, 0.0
        %621 = vadd.xlane.f32.xlu0 %v620
        %v622 = vpop.xlane.xlu0 %621
        %v624 = vsel %vm586, %v604, 0
        %626 = vmatpush.msra.mxu0 0.0
        %627 = vmatpush.msra.mxu0 0.0
        %628 = vmatpush.msra.mxu0 0.0
        %629 = vmatpush.msra.mxu0 0.0
        %630 = vmatpush.msra.mxu0 0.0
        %631 = vmatpush.msra.mxu0 0.0
        %632 = vmatpush.msra.mxu0 0.0
        %633 = vmatpush.msra.mxu0 0.0
        %634 = vmatpush.msra.mxu0 0.0
        %635 = vmatpush.msra.mxu0 0.0
        %636 = vmatpush.msra.mxu0 0.0
        %637 = vmatpush.msra.mxu0 0.0
        %638 = vmatpush.msra.mxu0 0.0
        %639 = vmatpush.msra.mxu0 0.0
        %640 = vmatpush.msra.mxu0 %v466
        %641 = vmatpush.msra.mxu0 %v465
        %642 = vmatmul.f32.gmra.mxu0 %v624
        %v643 = vpop.f32.mrf.mxu0
        %v644 = vadd.f32 0.0, %v643
        %645 = vdwg.mxu0
        %v647 = vsel %vm586, %v606, 0
        %649 = vmatpush.msra.mxu0 0.0
        %650 = vmatpush.msra.mxu0 0.0
        %651 = vmatpush.msra.mxu0 0.0
        %652 = vmatpush.msra.mxu0 0.0
        %653 = vmatpush.msra.mxu0 0.0
        %654 = vmatpush.msra.mxu0 0.0
        %655 = vmatpush.msra.mxu0 0.0
        %656 = vmatpush.msra.mxu0 0.0
        %657 = vmatpush.msra.mxu0 0.0
        %658 = vmatpush.msra.mxu0 0.0
        %659 = vmatpush.msra.mxu0 0.0
        %660 = vmatpush.msra.mxu0 0.0
        %661 = vmatpush.msra.mxu0 0.0
        %662 = vmatpush.msra.mxu0 0.0
        %663 = vmatpush.msra.mxu0 %v468
        %664 = vmatpush.msra.mxu0 %v467
        %665 = vmatmul.f32.gmra.mxu0 %v647
        %v666 = vpop.f32.mrf.mxu0
        %v667 = vadd.f32 0.0, %v666
        %668 = vdwg.mxu0
        %v670 = vsel %vm586, %v608, 0
        %672 = vmatpush.msra.mxu0 0.0
        %673 = vmatpush.msra.mxu0 0.0
        %674 = vmatpush.msra.mxu0 0.0
        %675 = vmatpush.msra.mxu0 0.0
        %676 = vmatpush.msra.mxu0 0.0
        %677 = vmatpush.msra.mxu0 0.0
        %678 = vmatpush.msra.mxu0 0.0
        %679 = vmatpush.msra.mxu0 0.0
        %680 = vmatpush.msra.mxu0 0.0
        %681 = vmatpush.msra.mxu0 0.0
        %682 = vmatpush.msra.mxu0 0.0
        %683 = vmatpush.msra.mxu0 0.0
        %684 = vmatpush.msra.mxu0 0.0
        %685 = vmatpush.msra.mxu0 0.0
        %686 = vmatpush.msra.mxu0 %v470
        %687 = vmatpush.msra.mxu0 %v469
        %688 = vmatmul.f32.gmra.mxu0 %v670
        %v689 = vpop.f32.mrf.mxu0
        %v690 = vadd.f32 0.0, %v689
        %691 = vdwg.mxu0
        %v693 = vsel %vm586, %v610, 0
        %695 = vmatpush.msra.mxu0 0.0
        %696 = vmatpush.msra.mxu0 0.0
        %697 = vmatpush.msra.mxu0 0.0
        %698 = vmatpush.msra.mxu0 0.0
        %699 = vmatpush.msra.mxu0 0.0
        %700 = vmatpush.msra.mxu0 0.0
        %701 = vmatpush.msra.mxu0 0.0
        %702 = vmatpush.msra.mxu0 0.0
        %703 = vmatpush.msra.mxu0 0.0
        %704 = vmatpush.msra.mxu0 0.0
        %705 = vmatpush.msra.mxu0 0.0
        %706 = vmatpush.msra.mxu0 0.0
        %707 = vmatpush.msra.mxu0 0.0
        %708 = vmatpush.msra.mxu0 0.0
        %709 = vmatpush.msra.mxu0 %v472
        %710 = vmatpush.msra.mxu0 %v471
        %711 = vmatmul.f32.gmra.mxu0 %v693
        %v712 = vpop.f32.mrf.mxu0
        %v713 = vadd.f32 0.0, %v712
        %714 = vdwg.mxu0
        %v715 = vrcp.pop %v613
        %v716 = vrcp.pop %v616
        %v717 = vrcp.pop %v619
        %v718 = vrcp.pop %v622
        %v719 = vmul.f32 %v644, %v715
        %v720 = vmul.f32 %v667, %v716
        %v721 = vmul.f32 %v690, %v717
        %v722 = vmul.f32 %v713, %v718
        %724 = vrot.lane.b32.xlu0 %v720, 8
        %v725 = vpop.permute.xlu0 %724
        %728 = vrot.lane.b32.xlu0 %v721, 16
        %v729 = vpop.permute.xlu0 %728
        %732 = vrot.lane.b32.xlu0 %v722, 24
        %v733 = vpop.permute.xlu0 %732
        %v735 = vsel %vm473, %v719, %v725
        %v736 = vsel %vm586, %v735, %v729
        %vm737 = vcmask 195584
        %v738 = vsel %vm737, %v736, %v733
        %v739 = vld [vmem:[#allocation9] sm:$0xff]
        %v740 = vld [vmem:[#allocation9 + $0x8] sm:$0xff]
        %v741 = vld [vmem:[#allocation9 + $0x10] sm:$0xff]
        %v742 = vld [vmem:[#allocation9 + $0x18] sm:$0xff]
        %v743 = vld [vmem:[%s4] sm:$0x1]
        %v745 = vperm.slane %v743, 0
        %v748 = vsel %vm424, %v738, 0
        %750 = vmatpush.msra.mxu0 0.0
        %751 = vmatpush.msra.mxu0 0.0
        %752 = vmatpush.msra.mxu0 0.0
        %753 = vmatpush.msra.mxu0 0.0
        %754 = vmatpush.msra.mxu0 0.0
        %755 = vmatpush.msra.mxu0 0.0
        %756 = vmatpush.msra.mxu0 0.0
        %757 = vmatpush.msra.mxu0 0.0
        %758 = vmatpush.msra.mxu0 0.0
        %759 = vmatpush.msra.mxu0 0.0
        %760 = vmatpush.msra.mxu0 0.0
        %761 = vmatpush.msra.mxu0 0.0
        %762 = vmatpush.msra.mxu0 %v742
        %763 = vmatpush.msra.mxu0 %v741
        %764 = vmatpush.msra.mxu0 %v740
        %765 = vmatpush.msra.mxu0 %v739
        %766 = vmatmul.f32.gmra.mxu0 %v748
        %v767 = vpop.f32.mrf.mxu0
        %v768 = vadd.f32 %v745, %v767
        %769 = vdwg.mxu0
        %770 = vst.msk [vmem:[%s308] sm:$0xff] %vm424, %v768
        %s771 = sand.u32 %s156, 1
        %s772 = scalar_lea.sflag [#allocation5], %s771
        %s773 = sand.u32 %s156, 1
        %s774 = smul.addr %s773, 8
        %s775 = scalar_lea.vmem [#allocation11], %s774
        // Predicated region
        $region61: #{tpu_custom_call.1} parent=39 // pred_check
          %p776 = pneg %p166
        $region62: #{tpu_custom_call.1} parent=39 // pred_check_branch
          %778 = sbr.rel (%p776) target = $region64
        $region63: #{tpu_custom_call.1} parent=39 // pred_region
          %780 = vsyncadd %s772, 0
          %s781 = smul.addr %s28, 2
          %s782 = sadd.s32 %s29, %s781
          %s783 = smul.addr %s782, 8
          %s784 = scalar_lea.hbm %s5, %s783
          %s786 = sshll.u32 %s775, 4
          %s787 = int_to_ptr.vmem [resolvable:$true] %s786
          %s788 = sshll.u32 %s784, 4
          %s789 = int_to_ptr.hbm [resolvable:$true] %s788
          %791 = dma.vmem_to_hbm [thread:$0]  %s787, 128, %s789, %s772
        $region64: #{tpu_custom_call.1} parent=39 // pred_fallthru
          _
      $region40: #{tpu_custom_call.1} parent=5 // pred_fallthru
        _
      %p792 = scmp.le.s32.totalorder 2, %s19
      // Predicated region
      $region65: #{tpu_custom_call.1} parent=5 // pred_check
        %p793 = pneg %p792
      $region66: #{tpu_custom_call.1} parent=5 // pred_check_branch
        %795 = sbr.rel (%p793) target = $region68
      $region67: #{tpu_custom_call.1} parent=5 // pred_region
        %s796 = ssub.s32 %s19, 2
        // Predicated region
        $region69: #{tpu_custom_call.1} parent=67 // pred_check
          %p797 = pneg %p172
        $region70: #{tpu_custom_call.1} parent=67 // pred_check_branch
          %799 = sbr.rel (%p797) target = $region72
        $region71: #{tpu_custom_call.1} parent=67 // pred_region
          %s800 = sand.u32 %s157, 1
          %s801 = scalar_lea.sflag [#allocation5], %s800
          %s802 = sand.u32 %s157, 1
          %s803 = smul.addr %s802, 8
          %s804 = scalar_lea.vmem [#allocation11], %s803
          %806 = dma.done %s801, 128
        $region72: #{tpu_custom_call.1} parent=67 // pred_fallthru
          _
      $region68: #{tpu_custom_call.1} parent=5 // pred_fallthru
        _
    $region6: #{tpu_custom_call.1} parent=1 // loop_footer
      %s23 = sadd.s32 1, %s19
    $region7: #{tpu_custom_call.1} parent=1 // loop_footer_branch
      %18 = sbr.rel target = $region3
    $region8: #{tpu_custom_call.1} parent=1 // loop_exit
      _
    %807 = vsyncpa [#allocation4], 1
    %s808 = scalar_lea.sflag [#allocation4], 1
    %809 = vsyncpa %s808, 1
    %810 = vsyncpa [#allocation7], 1
    %811 = vsyncpa [#allocation10], 1
    %812 = vsyncpa [#allocation5], 1
    %s813 = scalar_lea.sflag [#allocation5], 1
    %814 = vsyncpa %s813, 1

</llo_original>
